<compile_context>
chip_gen: v6e
topology: v6e:2x2x1
jax: 0.10.0
libtpu: 0.0.40
codegen_flags: <defaults>
</compile_context>

<pallas_src>
import jax
import jax.numpy as jnp
from jax import lax
from jax.experimental import pallas as pl
from jax.experimental.pallas import tpu as pltpu


def downsample_a(x, *, block_budget_bytes=2 << 20):
    """Pallas implementation of DownsampleA.forward (stride=2)."""
    N, C, H, W = x.shape
    Ho = (H - 1) // 2 + 1          # AvgPool2d(kernel_size=1, stride=2) output size
    Wo = (W - 1) // 2 + 1
    P = Ho * Wo
    itemsize = jnp.dtype(x.dtype).itemsize

    # ---- pick the batch block size nb -------------------------------------------
    # Constraints: nb divides N; nb*2C % 8 == 0 (sublane rule for the non-full output
    # row-block dim); input block stays under the budget; keep >= ~4 grid steps when N
    # allows (pipelining + v7x 2-TC sharding).
    per_batch = C * H * W * itemsize
    cap = max(1, block_budget_bytes // per_batch)
    cap = min(cap, N, max(1, -(-N // 4)))
    nb = None
    for cand in range(cap, 0, -1):
        if N % cand == 0 and (cand * 2 * C) % 8 == 0:
            nb = cand
            break
    if nb is None:
        nb = N                      # full-extent row block is always layout-legal

    grid = (N // nb,)
    rows_in = nb * C                # input rows per block
    rows_out = nb * 2 * C           # output rows per block (pooled + zero halves)

    def kernel(x_ref, o_ref):
        # x_ref: (nb*C, H, W)   -- nb whole batches, all channels, spatial intact
        # o_ref: (nb*2C, Ho*Wo) -- lane-dense flattened spatial map
        # 0/1 lane-selection matrix for the stride-2 W subsample (exact in any dtype).
        w_ids = lax.broadcasted_iota(jnp.int32, (W, Wo), 0)
        wo_ids = lax.broadcasted_iota(jnp.int32, (W, Wo), 1)
        selw = (w_ids == 2 * wo_ids).astype(x_ref.dtype)

        # H subsample = read only even rows; W subsample = tiny (W, Wo) matmul.
        # Concatenating the per-row results along lanes yields exactly the
        # ho-major / wo-minor flattening of the pooled map.
        pieces = []
        for h in range(Ho):
            rows = x_ref[:, 2 * h, :]                                   # (nb*C, W)
            pieces.append(
                jnp.dot(rows, selw, preferred_element_type=jnp.float32))  # (nb*C, Wo)
        real = jnp.concatenate(pieces, axis=-1).astype(o_ref.dtype)      # (nb*C, P)

        # Zero the whole block once (covers the x.mul(0) half, no extra grid steps,
        # no compute), then overwrite the pooled half batch by batch (the real and
        # zero channel groups are interleaved per batch in the 2C channel dim).
        o_ref[...] = jnp.zeros(o_ref.shape, o_ref.dtype)
        for b in range(nb):
            o_ref[b * 2 * C:b * 2 * C + C, :] = real[b * C:(b + 1) * C, :]

    out_flat = pl.pallas_call(
        kernel,
        out_shape=jax.ShapeDtypeStruct((N * 2 * C, P), x.dtype),
        grid_spec=pltpu.PrefetchScalarGridSpec(
            num_scalar_prefetch=0,
            grid=grid,
            in_specs=[pl.BlockSpec((rows_in, H, W), lambda i: (i, 0, 0))],
            out_specs=pl.BlockSpec((rows_out, P), lambda i: (i, 0)),
        ),
        compiler_params=pltpu.CompilerParams(
            dimension_semantics=("parallel",),
        ),
    )(x.reshape(N * C, H, W))       # row-major compatible (free) reshape

    # Free reshape back to the PyTorch layout.
    return out_flat.reshape(N, 2 * C, Ho, Wo)


if __name__ == "__main__":
    key = jax.random.PRNGKey(0)
    x = jax.random.normal(key, (2, 4, 16, 16), dtype=jnp.float32)

    out = jax.block_until_ready(downsample_a(x))

    # Reference (plain JAX): AvgPool2d(k=1, s=2) == stride-2 subsample, concat zeros.
    pooled = x[:, :, ::2, ::2]
    expected = jnp.concatenate([pooled, jnp.zeros_like(pooled)], axis=1)

    if out.shape != expected.shape or out.dtype != expected.dtype:
        raise AssertionError(f"shape/dtype mismatch: {out.shape}/{out.dtype} vs "
                             f"{expected.shape}/{expected.dtype}")
    if not jnp.allclose(out, expected, atol=1e-6, rtol=1e-6):
        raise AssertionError("value mismatch vs reference")

    print("KERNEL_OK")
</pallas_src>

<mosaic_0001>
module attributes {stable_mosaic.version = 11 : i64} {
  func.func @kernel(%arg0: i32, %arg1: memref<4x16x16xf32, #tpu.memory_space<vmem>>, %arg2: memref<8x64xf32, #tpu.memory_space<vmem>>) attributes {dimension_semantics = [#tpu.dimension_semantics<parallel>], iteration_bounds = array<i64: 2>, scalar_prefetch = 0 : i64, scratch_operands = 0 : i64, tpu.core_type = #tpu.core_type<tc>, window_params = [{transform_indices = @transform_0, window_bounds = array<i64: 4, 16, 16>}, {transform_indices = @transform_1, window_bounds = array<i64: 8, 64>}]} {
    %0 = tpu.iota {dimensions = array<i32: 0>} : vector<16x8xi32>
    %1 = tpu.iota {dimensions = array<i32: 1>} : vector<16x8xi32>
    %c2_i32 = arith.constant 2 : i32
    %2 = vector.broadcast %c2_i32 : i32 to vector<16x8xi32>
    %3 = arith.muli %2, %1 : vector<16x8xi32>
    %4 = arith.cmpi eq, %0, %3 : vector<16x8xi32>
    %5 = arith.extui %4 : vector<16x8xi1> to vector<16x8xi32>
    %6 = arith.sitofp %5 : vector<16x8xi32> to vector<16x8xf32>
    %c0 = arith.constant 0 : index
    %c0_0 = arith.constant 0 : index
    %c0_1 = arith.constant 0 : index
    %7 = vector.load %arg1[%c0, %c0_0, %c0_1] : memref<4x16x16xf32, #tpu.memory_space<vmem>>, vector<4x1x16xf32>
    %8 = vector.shape_cast %7 : vector<4x1x16xf32> to vector<4x16xf32>
    %cst = arith.constant dense<0.000000e+00> : vector<4x8xf32>
    %9 = tpu.matmul %8, %6, %cst {dimension_numbers = #tpu.dot_dimension_numbers<[1], [0], [0], [1], [0, 0, 1, 1], [], []>} : vector<4x16xf32>, vector<16x8xf32>, vector<4x8xf32> -> vector<4x8xf32>
    %c0_2 = arith.constant 0 : index
    %c2 = arith.constant 2 : index
    %c0_3 = arith.constant 0 : index
    %10 = vector.load %arg1[%c0_2, %c2, %c0_3] : memref<4x16x16xf32, #tpu.memory_space<vmem>>, vector<4x1x16xf32>
    %11 = vector.shape_cast %10 : vector<4x1x16xf32> to vector<4x16xf32>
    %cst_4 = arith.constant dense<0.000000e+00> : vector<4x8xf32>
    %12 = tpu.matmul %11, %6, %cst_4 {dimension_numbers = #tpu.dot_dimension_numbers<[1], [0], [0], [1], [0, 0, 1, 1], [], []>} : vector<4x16xf32>, vector<16x8xf32>, vector<4x8xf32> -> vector<4x8xf32>
    %c0_5 = arith.constant 0 : index
    %c4 = arith.constant 4 : index
    %c0_6 = arith.constant 0 : index
    %13 = vector.load %arg1[%c0_5, %c4, %c0_6] : memref<4x16x16xf32, #tpu.memory_space<vmem>>, vector<4x1x16xf32>
    %14 = vector.shape_cast %13 : vector<4x1x16xf32> to vector<4x16xf32>
    %cst_7 = arith.constant dense<0.000000e+00> : vector<4x8xf32>
    %15 = tpu.matmul %14, %6, %cst_7 {dimension_numbers = #tpu.dot_dimension_numbers<[1], [0], [0], [1], [0, 0, 1, 1], [], []>} : vector<4x16xf32>, vector<16x8xf32>, vector<4x8xf32> -> vector<4x8xf32>
    %c0_8 = arith.constant 0 : index
    %c6 = arith.constant 6 : index
    %c0_9 = arith.constant 0 : index
    %16 = vector.load %arg1[%c0_8, %c6, %c0_9] : memref<4x16x16xf32, #tpu.memory_space<vmem>>, vector<4x1x16xf32>
    %17 = vector.shape_cast %16 : vector<4x1x16xf32> to vector<4x16xf32>
    %cst_10 = arith.constant dense<0.000000e+00> : vector<4x8xf32>
    %18 = tpu.matmul %17, %6, %cst_10 {dimension_numbers = #tpu.dot_dimension_numbers<[1], [0], [0], [1], [0, 0, 1, 1], [], []>} : vector<4x16xf32>, vector<16x8xf32>, vector<4x8xf32> -> vector<4x8xf32>
    %c0_11 = arith.constant 0 : index
    %c8 = arith.constant 8 : index
    %c0_12 = arith.constant 0 : index
    %19 = vector.load %arg1[%c0_11, %c8, %c0_12] : memref<4x16x16xf32, #tpu.memory_space<vmem>>, vector<4x1x16xf32>
    %20 = vector.shape_cast %19 : vector<4x1x16xf32> to vector<4x16xf32>
    %cst_13 = arith.constant dense<0.000000e+00> : vector<4x8xf32>
    %21 = tpu.matmul %20, %6, %cst_13 {dimension_numbers = #tpu.dot_dimension_numbers<[1], [0], [0], [1], [0, 0, 1, 1], [], []>} : vector<4x16xf32>, vector<16x8xf32>, vector<4x8xf32> -> vector<4x8xf32>
    %c0_14 = arith.constant 0 : index
    %c10 = arith.constant 10 : index
    %c0_15 = arith.constant 0 : index
    %22 = vector.load %arg1[%c0_14, %c10, %c0_15] : memref<4x16x16xf32, #tpu.memory_space<vmem>>, vector<4x1x16xf32>
    %23 = vector.shape_cast %22 : vector<4x1x16xf32> to vector<4x16xf32>
    %cst_16 = arith.constant dense<0.000000e+00> : vector<4x8xf32>
    %24 = tpu.matmul %23, %6, %cst_16 {dimension_numbers = #tpu.dot_dimension_numbers<[1], [0], [0], [1], [0, 0, 1, 1], [], []>} : vector<4x16xf32>, vector<16x8xf32>, vector<4x8xf32> -> vector<4x8xf32>
    %c0_17 = arith.constant 0 : index
    %c12 = arith.constant 12 : index
    %c0_18 = arith.constant 0 : index
    %25 = vector.load %arg1[%c0_17, %c12, %c0_18] : memref<4x16x16xf32, #tpu.memory_space<vmem>>, vector<4x1x16xf32>
    %26 = vector.shape_cast %25 : vector<4x1x16xf32> to vector<4x16xf32>
    %cst_19 = arith.constant dense<0.000000e+00> : vector<4x8xf32>
    %27 = tpu.matmul %26, %6, %cst_19 {dimension_numbers = #tpu.dot_dimension_numbers<[1], [0], [0], [1], [0, 0, 1, 1], [], []>} : vector<4x16xf32>, vector<16x8xf32>, vector<4x8xf32> -> vector<4x8xf32>
    %c0_20 = arith.constant 0 : index
    %c14 = arith.constant 14 : index
    %c0_21 = arith.constant 0 : index
    %28 = vector.load %arg1[%c0_20, %c14, %c0_21] : memref<4x16x16xf32, #tpu.memory_space<vmem>>, vector<4x1x16xf32>
    %29 = vector.shape_cast %28 : vector<4x1x16xf32> to vector<4x16xf32>
    %cst_22 = arith.constant dense<0.000000e+00> : vector<4x8xf32>
    %30 = tpu.matmul %29, %6, %cst_22 {dimension_numbers = #tpu.dot_dimension_numbers<[1], [0], [0], [1], [0, 0, 1, 1], [], []>} : vector<4x16xf32>, vector<16x8xf32>, vector<4x8xf32> -> vector<4x8xf32>
    %31 = tpu.concatenate %9, %12, %15, %18, %21, %24, %27, %30 in 1 : vector<4x8xf32>, vector<4x8xf32>, vector<4x8xf32>, vector<4x8xf32>, vector<4x8xf32>, vector<4x8xf32>, vector<4x8xf32>, vector<4x8xf32> -> vector<4x64xf32>
    %cst_23 = arith.constant 0.000000e+00 : f32
    %32 = vector.broadcast %cst_23 : f32 to vector<8x64xf32>
    %c0_24 = arith.constant 0 : index
    %c0_25 = arith.constant 0 : index
    %33 = vector.load %arg2[%c0_24, %c0_25] : memref<8x64xf32, #tpu.memory_space<vmem>>, vector<8x64xf32>
    tpu.vector_store %arg2[%c0_24, %c0_25], %32 {strides = array<i32>} : memref<8x64xf32, #tpu.memory_space<vmem>>, vector<8x64xf32>,
    %c0_26 = arith.constant 0 : index
    %c0_27 = arith.constant 0 : index
    %34 = vector.load %arg2[%c0_26, %c0_27] : memref<8x64xf32, #tpu.memory_space<vmem>>, vector<4x64xf32>
    tpu.vector_store %arg2[%c0_26, %c0_27], %31 {strides = array<i32>} : memref<8x64xf32, #tpu.memory_space<vmem>>, vector<4x64xf32>,
    return
  }
  func.func @transform_0(%arg0: i32) -> (i32, i32, i32) {
    %c0_i32 = arith.constant 0 : i32
    %c0_i32_0 = arith.constant 0 : i32
    %c0_i32_1 = arith.constant 0 : i32
    return %arg0, %c0_i32, %c0_i32_0 : i32, i32, i32
  }
  func.func @transform_1(%arg0: i32) -> (i32, i32) {
    %c0_i32 = arith.constant 0 : i32
    %c0_i32_0 = arith.constant 0 : i32
    return %arg0, %c0_i32 : i32, i32
  }
}

</mosaic_0001>

<llo_original>
// kernel: tpu_custom_call.1
$region0: #{tpu_custom_call.1}
  #allocation0 [shape = 'u32[]', space=smem, size = 0x4, offset = 0x4, fixed_abs, tag = 'smem constant byte address 0x4 - core index']
  #allocation1 [shape = 'u32[144,128]{1,0:T(1,128)}', space=vmem, size = 0x12000, scoped, tag = 'internal scratch']
  %s0 = inlined_call_operand.hbm [shape: f32[8,16,16], index: 0, kind: input, shape index: {}]
  %s1 = inlined_call_operand.hbm [shape: f32[16,64], index: 1, kind: output, shape index: {}]
  %s2 = sld [smem:[#allocation0]]
  $region41: #{tpu_custom_call.1} parent=0
    _
  %s4 = ssub.s32 1, %s2
  %s5 = scalar_select 0, %s4, %s2
  $region1: #{tpu_custom_call.1} parent=0
    #allocation2 [shape = 'u8[65536]{0}', space=vmem, size = 0x10000, scoped, tag = 'input window, operand 0']
    #allocation3 [shape = 's32[2]{0}', space=sflag, size = 0x8, scoped, tag = 'scoped memory for tpu_custom_call.1']
    #allocation4 [shape = 's32[2]{0}', space=sflag, size = 0x8, scoped, tag = 'scoped memory for tpu_custom_call.1']
    #allocation5 [shape = 'u8[8192]{0}', space=vmem, size = 0x2000, scoped, tag = 'output window, operand 0']
    %6 = vsyncpa [#allocation3], 0
    %s7 = scalar_lea.sflag [#allocation3], 1
    %8 = vsyncpa %s7, 0
    %9 = vsyncpa [#allocation4], 0
    %s10 = scalar_lea.sflag [#allocation4], 1
    %11 = vsyncpa %s10, 0
    loop: start=0, step=1, limit=4
    $region2: #{tpu_custom_call.1} parent=1 // loop_pre_header
      _
    $region3: #{tpu_custom_call.1} parent=1 // loop_header
      %s13 = sphi 0, %s17
      %p14 = scmp.ge.s32.totalorder %s13, 4
      %s23 = sphi 0, %s25
      %s26 = sphi 0, %s23
      %s27 = sphi 0, %s26
      %s43 = sphi 0, %s27
      %s49 = sphi 0, %s51
      %s52 = sphi 0, %s49
      %s53 = sphi 0, %s52
      %s69 = sphi 0, %s53
    $region4: #{tpu_custom_call.1} parent=1 // loop_header_branch
      %16 = sbr.rel (%p14) target = $region8
    $region5: #{tpu_custom_call.1} parent=1 // loop_body
      %s18 = ssub.s32 %s13, 1
      %s19 = ssub.s32 %s13, 2
      %s20 = sadd.s32 %s13, 1
      %s21 = ssub.s32 %s13, %s20
      %p22 = scmp.eq.s32.totalorder %s21, 0
      %s24 = sadd.s32 %s23, 1
      %s25 = scalar_select %p22, %s23, %s24
      %p28 = pneg %p22
      %p29 = scmp.eq.s32.totalorder %s13, 1
      %p30 = por %p28, %p29
      %p31 = scmp.ne.s32.totalorder %s23, %s26
      %p32 = scmp.eq.s32.totalorder %s13, 0
      %p33 = por %p31, %p32
      %p34 = scmp.ne.s32.totalorder %s23, %s26
      %p35 = scmp.eq.s32.totalorder %s18, 1
      %p36 = por %p34, %p35
      %p37 = scmp.ne.s32.totalorder %s26, %s27
      %p38 = scmp.eq.s32.totalorder %s18, 0
      %p39 = por %p37, %p38
      %p40 = scmp.ne.s32.totalorder %s26, %s27
      %p41 = scmp.eq.s32.totalorder %s19, 1
      %p42 = por %p40, %p41
      %p44 = scmp.ne.s32.totalorder %s27, %s43
      %p45 = scmp.eq.s32.totalorder %s19, 0
      %p46 = por %p44, %p45
      %s47 = ssub.s32 %s13, %s20
      %p48 = scmp.eq.s32.totalorder %s47, 0
      %s50 = sadd.s32 %s49, 1
      %s51 = scalar_select %p48, %s49, %s50
      %p54 = pneg %p48
      %p55 = scmp.eq.s32.totalorder %s13, 1
      %p56 = por %p54, %p55
      %p57 = scmp.ne.s32.totalorder %s49, %s52
      %p58 = scmp.eq.s32.totalorder %s13, 0
      %p59 = por %p57, %p58
      %p60 = scmp.ne.s32.totalorder %s49, %s52
      %p61 = scmp.eq.s32.totalorder %s18, 1
      %p62 = por %p60, %p61
      %p63 = scmp.ne.s32.totalorder %s52, %s53
      %p64 = scmp.eq.s32.totalorder %s18, 0
      %p65 = por %p63, %p64
      %p66 = scmp.ne.s32.totalorder %s52, %s53
      %p67 = scmp.eq.s32.totalorder %s19, 1
      %p68 = por %p66, %p67
      %p70 = scmp.ne.s32.totalorder %s53, %s69
      %p71 = scmp.eq.s32.totalorder %s19, 0
      %p72 = por %p70, %p71
      %p73 = scmp.le.s32.totalorder 1, %s13
      %p74 = scmp.lt.s32.totalorder %s13, 3
      %p75 = pnand %p73, %p74
      %p76 = pneg %p75
      // Predicated region
      $region9: #{tpu_custom_call.1} parent=5 // pred_check
        _
      $region10: #{tpu_custom_call.1} parent=5 // pred_check_branch
        %78 = sbr.rel (%p75) target = $region12
      $region11: #{tpu_custom_call.1} parent=5 // pred_region
        %s79 = ssub.s32 %s13, 1
      $region12: #{tpu_custom_call.1} parent=5 // pred_fallthru
        _
      %p80 = scmp.lt.s32.totalorder %s13, 2
      // Predicated region
      $region13: #{tpu_custom_call.1} parent=5 // pred_check
        %p81 = pneg %p80
      $region14: #{tpu_custom_call.1} parent=5 // pred_check_branch
        %83 = sbr.rel (%p81) target = $region16
      $region15: #{tpu_custom_call.1} parent=5 // pred_region
        // Predicated region
        $region17: #{tpu_custom_call.1} parent=15 // pred_check
          %p84 = pneg %p33
        $region18: #{tpu_custom_call.1} parent=15 // pred_check_branch
          %86 = sbr.rel (%p84) target = $region20
        $region19: #{tpu_custom_call.1} parent=15 // pred_region
          %s87 = sand.u32 %s23, 1
          %s88 = scalar_lea.sflag [#allocation3], %s87
          %s89 = sand.u32 %s23, 1
          %s90 = smul.addr %s89, 64
          %s91 = scalar_lea.vmem [#allocation2], %s90
          %s92 = smul.u32 4, %s13
          %s94 = ssub.s32 1024, 1024
          %95 = vsyncadd %s88, %s94
          %s96 = smul.addr %s92, 2
          %s97 = smul.addr %s96, 128
          %s98 = scalar_lea.hbm %s0, %s97
          %s99 = sshll.u32 %s91, 4
          %s100 = int_to_ptr.vmem [resolvable:$true] %s99
          %105 = dma.hbm_to_vmem [thread:$0]  %s98, 1024, %s100, %s88, 128, 128, 8
        $region20: #{tpu_custom_call.1} parent=15 // pred_fallthru
          _
      $region16: #{tpu_custom_call.1} parent=5 // pred_fallthru
        _
      %p106 = scmp.le.s32.totalorder 1, %s13
      %p107 = scmp.lt.s32.totalorder %s13, 3
      %p108 = pnand %p106, %p107
      %p109 = pneg %p108
      // Predicated region
      $region21: #{tpu_custom_call.1} parent=5 // pred_check
        _
      $region22: #{tpu_custom_call.1} parent=5 // pred_check_branch
        %111 = sbr.rel (%p108) target = $region24
      $region23: #{tpu_custom_call.1} parent=5 // pred_region
        %s112 = ssub.s32 %s13, 1
        %s113 = sand.u32 %s26, 1
        %s114 = scalar_lea.sflag [#allocation3], %s113
        %s115 = sand.u32 %s26, 1
        %s116 = smul.addr %s115, 64
        %s117 = scalar_lea.vmem [#allocation2], %s116
        // Predicated region
        $region25: #{tpu_custom_call.1} parent=23 // pred_check
          %p118 = pneg %p39
        $region26: #{tpu_custom_call.1} parent=23 // pred_check_branch
          %120 = sbr.rel (%p118) target = $region28
        $region27: #{tpu_custom_call.1} parent=23 // pred_region
          %121 = dma.done %s114, 1024
        $region28: #{tpu_custom_call.1} parent=23 // pred_fallthru
          _
        %s122 = sand.u32 %s26, 1
        %s123 = scalar_lea.sflag [#allocation3], %s122
        %s124 = sand.u32 %s26, 1
        %s125 = smul.addr %s124, 64
        %s126 = scalar_lea.vmem [#allocation2], %s125
        %p127 = pneg %p39
        %p128 = pneg %p36
        %p129 = pneg %p65
        %p130 = pneg %p62
        %s131 = sand.u32 %s52, 1
        %s132 = scalar_lea.sflag [#allocation4], %s131
        %s133 = sand.u32 %s52, 1
        %s134 = smul.addr %s133, 8
        %s135 = scalar_lea.vmem [#allocation5], %s134
        %s136 = smul.u32 4, %s18
        %v137 = vlaneseq
        %v138 = vshrl.u32 %v137, 7
        %v139 = vadd.s32 %v138, 8
        %v140 = vlaneseq
        %v141 = vand.u32 %v140, 127
        %v142 = vmul.u32 %v141, 2
        %vm143 = vcmp.eq.s32.totalorder %v138, %v142
        %vm144 = vcmp.eq.s32.totalorder %v139, %v142
        %v145 = vsel %vm143, 1, 0
        %v146 = vsel %vm144, 1, 0
        %v147 = vcvt.s32.f32 %v145
        %v148 = vcvt.s32.f32 %v146
        %v149 = vld [vmem:[%s117] sm:$0x1]
        %v150 = vld [vmem:[%s117 + $0x10] sm:$0x1]
        %v151 = vld [vmem:[%s117 + $0x20] sm:$0x1]
        %v152 = vld [vmem:[%s117 + $0x30] sm:$0x1]
        %v157 = vrot.slane %v150, 7
        %vm158 = vcmask 1041409
        %v159 = vsel %vm158, %v157, %v149
        %v160 = vrot.slane %v151, 6
        %vm161 = vcmask 1042434
        %v162 = vsel %vm161, %v160, %v159
        %v163 = vrot.slane %v152, 5
        %vm164 = vcmask 1043459
        %v165 = vsel %vm164, %v163, %v162
        %vm166 = vcmask 130048
        %v167 = vsel %vm166, %v165, 0
        %169 = vmatprep.subr.mxu0 0.0
        %170 = vmatpush1.msra.mxu0 0.0
        %171 = vmatprep.subr.mxu0 0.0
        %172 = vmatpush1.msra.mxu0 0.0
        %173 = vmatprep.subr.mxu0 0.0
        %174 = vmatpush1.msra.mxu0 0.0
        %175 = vmatprep.subr.mxu0 0.0
        %176 = vmatpush1.msra.mxu0 0.0
        %177 = vmatprep.subr.mxu0 0.0
        %178 = vmatpush1.msra.mxu0 0.0
        %179 = vmatprep.subr.mxu0 0.0
        %180 = vmatpush1.msra.mxu0 0.0
        %181 = vmatprep.subr.mxu0 0.0
        %182 = vmatpush1.msra.mxu0 0.0
        %183 = vmatprep.subr.mxu0 0.0
        %184 = vmatpush1.msra.mxu0 0.0
        %185 = vmatprep.subr.mxu0 0.0
        %186 = vmatpush1.msra.mxu0 0.0
        %187 = vmatprep.subr.mxu0 0.0
        %188 = vmatpush1.msra.mxu0 0.0
        %189 = vmatprep.subr.mxu0 0.0
        %190 = vmatpush1.msra.mxu0 0.0
        %191 = vmatprep.subr.mxu0 0.0
        %192 = vmatpush1.msra.mxu0 0.0
        %193 = vmatprep.subr.mxu0 0.0
        %194 = vmatpush1.msra.mxu0 0.0
        %195 = vmatprep.subr.mxu0 0.0
        %196 = vmatpush1.msra.mxu0 0.0
        %197 = vmatprep.subr.mxu0 0.0
        %198 = vmatpush1.msra.mxu0 %v148
        %199 = vmatprep.subr.mxu0 0.0
        %200 = vmatpush1.msra.mxu0 %v147
        %201 = vmatprep.subr.mxu0 0.0
        %202 = vmatpush2.msra.mxu0 0.0
        %203 = vmatprep.subr.mxu0 0.0
        %204 = vmatpush2.msra.mxu0 0.0
        %205 = vmatprep.subr.mxu0 0.0
        %206 = vmatpush2.msra.mxu0 0.0
        %207 = vmatprep.subr.mxu0 0.0
        %208 = vmatpush2.msra.mxu0 0.0
        %209 = vmatprep.subr.mxu0 0.0
        %210 = vmatpush2.msra.mxu0 0.0
        %211 = vmatprep.subr.mxu0 0.0
        %212 = vmatpush2.msra.mxu0 0.0
        %213 = vmatprep.subr.mxu0 0.0
        %214 = vmatpush2.msra.mxu0 0.0
        %215 = vmatprep.subr.mxu0 0.0
        %216 = vmatpush2.msra.mxu0 0.0
        %217 = vmatprep.subr.mxu0 0.0
        %218 = vmatpush2.msra.mxu0 0.0
        %219 = vmatprep.subr.mxu0 0.0
        %220 = vmatpush2.msra.mxu0 0.0
        %221 = vmatprep.subr.mxu0 0.0
        %222 = vmatpush2.msra.mxu0 0.0
        %223 = vmatprep.subr.mxu0 0.0
        %224 = vmatpush2.msra.mxu0 0.0
        %225 = vmatprep.subr.mxu0 0.0
        %226 = vmatpush2.msra.mxu0 0.0
        %227 = vmatprep.subr.mxu0 0.0
        %228 = vmatpush2.msra.mxu0 0.0
        %229 = vmatprep.subr.mxu0 0.0
        %230 = vmatpush2.msra.mxu0 0.0
        %231 = vmatprep.subr.mxu0 0.0
        %232 = vmatpush2.msra.mxu0 0.0
        %233 = vmatprep.mubr.f32.mxu0 0.0
        %234 = vmatmul.mubr.f32.gmra.mxu0 %v167
        %v235 = vpop.f32.mrf.mxu0
        %v236 = vadd.f32 0.0, %v235
        %v237 = vpop.f32.mrf.mxu0
        %238 = vdwg.mxu0
        %v239 = vld [vmem:[%s117 + $0x2] sm:$0x1]
        %v240 = vld [vmem:[%s117 + $0x12] sm:$0x1]
        %v241 = vld [vmem:[%s117 + $0x22] sm:$0x1]
        %v242 = vld [vmem:[%s117 + $0x32] sm:$0x1]
        %v247 = vrot.slane %v240, 7
        %v248 = vsel %vm158, %v247, %v239
        %v249 = vrot.slane %v241, 6
        %v250 = vsel %vm161, %v249, %v248
        %v251 = vrot.slane %v242, 5
        %v252 = vsel %vm164, %v251, %v250
        %v253 = vsel %vm166, %v252, 0
        %255 = vmatprep.subr.mxu0 0.0
        %256 = vmatpush1.msra.mxu0 0.0
        %257 = vmatprep.subr.mxu0 0.0
        %258 = vmatpush1.msra.mxu0 0.0
        %259 = vmatprep.subr.mxu0 0.0
        %260 = vmatpush1.msra.mxu0 0.0
        %261 = vmatprep.subr.mxu0 0.0
        %262 = vmatpush1.msra.mxu0 0.0
        %263 = vmatprep.subr.mxu0 0.0
        %264 = vmatpush1.msra.mxu0 0.0
        %265 = vmatprep.subr.mxu0 0.0
        %266 = vmatpush1.msra.mxu0 0.0
        %267 = vmatprep.subr.mxu0 0.0
        %268 = vmatpush1.msra.mxu0 0.0
        %269 = vmatprep.subr.mxu0 0.0
        %270 = vmatpush1.msra.mxu0 0.0
        %271 = vmatprep.subr.mxu0 0.0
        %272 = vmatpush1.msra.mxu0 0.0
        %273 = vmatprep.subr.mxu0 0.0
        %274 = vmatpush1.msra.mxu0 0.0
        %275 = vmatprep.subr.mxu0 0.0
        %276 = vmatpush1.msra.mxu0 0.0
        %277 = vmatprep.subr.mxu0 0.0
        %278 = vmatpush1.msra.mxu0 0.0
        %279 = vmatprep.subr.mxu0 0.0
        %280 = vmatpush1.msra.mxu0 0.0
        %281 = vmatprep.subr.mxu0 0.0
        %282 = vmatpush1.msra.mxu0 0.0
        %283 = vmatprep.subr.mxu0 0.0
        %284 = vmatpush1.msra.mxu0 %v148
        %285 = vmatprep.subr.mxu0 0.0
        %286 = vmatpush1.msra.mxu0 %v147
        %287 = vmatprep.subr.mxu0 0.0
        %288 = vmatpush2.msra.mxu0 0.0
        %289 = vmatprep.subr.mxu0 0.0
        %290 = vmatpush2.msra.mxu0 0.0
        %291 = vmatprep.subr.mxu0 0.0
        %292 = vmatpush2.msra.mxu0 0.0
        %293 = vmatprep.subr.mxu0 0.0
        %294 = vmatpush2.msra.mxu0 0.0
        %295 = vmatprep.subr.mxu0 0.0
        %296 = vmatpush2.msra.mxu0 0.0
        %297 = vmatprep.subr.mxu0 0.0
        %298 = vmatpush2.msra.mxu0 0.0
        %299 = vmatprep.subr.mxu0 0.0
        %300 = vmatpush2.msra.mxu0 0.0
        %301 = vmatprep.subr.mxu0 0.0
        %302 = vmatpush2.msra.mxu0 0.0
        %303 = vmatprep.subr.mxu0 0.0
        %304 = vmatpush2.msra.mxu0 0.0
        %305 = vmatprep.subr.mxu0 0.0
        %306 = vmatpush2.msra.mxu0 0.0
        %307 = vmatprep.subr.mxu0 0.0
        %308 = vmatpush2.msra.mxu0 0.0
        %309 = vmatprep.subr.mxu0 0.0
        %310 = vmatpush2.msra.mxu0 0.0
        %311 = vmatprep.subr.mxu0 0.0
        %312 = vmatpush2.msra.mxu0 0.0
        %313 = vmatprep.subr.mxu0 0.0
        %314 = vmatpush2.msra.mxu0 0.0
        %315 = vmatprep.subr.mxu0 0.0
        %316 = vmatpush2.msra.mxu0 0.0
        %317 = vmatprep.subr.mxu0 0.0
        %318 = vmatpush2.msra.mxu0 0.0
        %319 = vmatprep.mubr.f32.mxu0 0.0
        %320 = vmatmul.mubr.f32.gmra.mxu0 %v253
        %v321 = vpop.f32.mrf.mxu0
        %v322 = vadd.f32 0.0, %v321
        %v323 = vpop.f32.mrf.mxu0
        %324 = vdwg.mxu0
        %v325 = vld [vmem:[%s117 + $0x4] sm:$0x1]
        %v326 = vld [vmem:[%s117 + $0x14] sm:$0x1]
        %v327 = vld [vmem:[%s117 + $0x24] sm:$0x1]
        %v328 = vld [vmem:[%s117 + $0x34] sm:$0x1]
        %v333 = vrot.slane %v326, 7
        %v334 = vsel %vm158, %v333, %v325
        %v335 = vrot.slane %v327, 6
        %v336 = vsel %vm161, %v335, %v334
        %v337 = vrot.slane %v328, 5
        %v338 = vsel %vm164, %v337, %v336
        %v339 = vsel %vm166, %v338, 0
        %341 = vmatprep.subr.mxu0 0.0
        %342 = vmatpush1.msra.mxu0 0.0
        %343 = vmatprep.subr.mxu0 0.0
        %344 = vmatpush1.msra.mxu0 0.0
        %345 = vmatprep.subr.mxu0 0.0
        %346 = vmatpush1.msra.mxu0 0.0
        %347 = vmatprep.subr.mxu0 0.0
        %348 = vmatpush1.msra.mxu0 0.0
        %349 = vmatprep.subr.mxu0 0.0
        %350 = vmatpush1.msra.mxu0 0.0
        %351 = vmatprep.subr.mxu0 0.0
        %352 = vmatpush1.msra.mxu0 0.0
        %353 = vmatprep.subr.mxu0 0.0
        %354 = vmatpush1.msra.mxu0 0.0
        %355 = vmatprep.subr.mxu0 0.0
        %356 = vmatpush1.msra.mxu0 0.0
        %357 = vmatprep.subr.mxu0 0.0
        %358 = vmatpush1.msra.mxu0 0.0
        %359 = vmatprep.subr.mxu0 0.0
        %360 = vmatpush1.msra.mxu0 0.0
        %361 = vmatprep.subr.mxu0 0.0
        %362 = vmatpush1.msra.mxu0 0.0
        %363 = vmatprep.subr.mxu0 0.0
        %364 = vmatpush1.msra.mxu0 0.0
        %365 = vmatprep.subr.mxu0 0.0
        %366 = vmatpush1.msra.mxu0 0.0
        %367 = vmatprep.subr.mxu0 0.0
        %368 = vmatpush1.msra.mxu0 0.0
        %369 = vmatprep.subr.mxu0 0.0
        %370 = vmatpush1.msra.mxu0 %v148
        %371 = vmatprep.subr.mxu0 0.0
        %372 = vmatpush1.msra.mxu0 %v147
        %373 = vmatprep.subr.mxu0 0.0
        %374 = vmatpush2.msra.mxu0 0.0
        %375 = vmatprep.subr.mxu0 0.0
        %376 = vmatpush2.msra.mxu0 0.0
        %377 = vmatprep.subr.mxu0 0.0
        %378 = vmatpush2.msra.mxu0 0.0
        %379 = vmatprep.subr.mxu0 0.0
        %380 = vmatpush2.msra.mxu0 0.0
        %381 = vmatprep.subr.mxu0 0.0
        %382 = vmatpush2.msra.mxu0 0.0
        %383 = vmatprep.subr.mxu0 0.0
        %384 = vmatpush2.msra.mxu0 0.0
        %385 = vmatprep.subr.mxu0 0.0
        %386 = vmatpush2.msra.mxu0 0.0
        %387 = vmatprep.subr.mxu0 0.0
        %388 = vmatpush2.msra.mxu0 0.0
        %389 = vmatprep.subr.mxu0 0.0
        %390 = vmatpush2.msra.mxu0 0.0
        %391 = vmatprep.subr.mxu0 0.0
        %392 = vmatpush2.msra.mxu0 0.0
        %393 = vmatprep.subr.mxu0 0.0
        %394 = vmatpush2.msra.mxu0 0.0
        %395 = vmatprep.subr.mxu0 0.0
        %396 = vmatpush2.msra.mxu0 0.0
        %397 = vmatprep.subr.mxu0 0.0
        %398 = vmatpush2.msra.mxu0 0.0
        %399 = vmatprep.subr.mxu0 0.0
        %400 = vmatpush2.msra.mxu0 0.0
        %401 = vmatprep.subr.mxu0 0.0
        %402 = vmatpush2.msra.mxu0 0.0
        %403 = vmatprep.subr.mxu0 0.0
        %404 = vmatpush2.msra.mxu0 0.0
        %405 = vmatprep.mubr.f32.mxu0 0.0
        %406 = vmatmul.mubr.f32.gmra.mxu0 %v339
        %v407 = vpop.f32.mrf.mxu0
        %v408 = vadd.f32 0.0, %v407
        %v409 = vpop.f32.mrf.mxu0
        %410 = vdwg.mxu0
        %v411 = vld [vmem:[%s117 + $0x6] sm:$0x1]
        %v412 = vld [vmem:[%s117 + $0x16] sm:$0x1]
        %v413 = vld [vmem:[%s117 + $0x26] sm:$0x1]
        %v414 = vld [vmem:[%s117 + $0x36] sm:$0x1]
        %v419 = vrot.slane %v412, 7
        %v420 = vsel %vm158, %v419, %v411
        %v421 = vrot.slane %v413, 6
        %v422 = vsel %vm161, %v421, %v420
        %v423 = vrot.slane %v414, 5
        %v424 = vsel %vm164, %v423, %v422
        %v425 = vsel %vm166, %v424, 0
        %427 = vmatprep.subr.mxu0 0.0
        %428 = vmatpush1.msra.mxu0 0.0
        %429 = vmatprep.subr.mxu0 0.0
        %430 = vmatpush1.msra.mxu0 0.0
        %431 = vmatprep.subr.mxu0 0.0
        %432 = vmatpush1.msra.mxu0 0.0
        %433 = vmatprep.subr.mxu0 0.0
        %434 = vmatpush1.msra.mxu0 0.0
        %435 = vmatprep.subr.mxu0 0.0
        %436 = vmatpush1.msra.mxu0 0.0
        %437 = vmatprep.subr.mxu0 0.0
        %438 = vmatpush1.msra.mxu0 0.0
        %439 = vmatprep.subr.mxu0 0.0
        %440 = vmatpush1.msra.mxu0 0.0
        %441 = vmatprep.subr.mxu0 0.0
        %442 = vmatpush1.msra.mxu0 0.0
        %443 = vmatprep.subr.mxu0 0.0
        %444 = vmatpush1.msra.mxu0 0.0
        %445 = vmatprep.subr.mxu0 0.0
        %446 = vmatpush1.msra.mxu0 0.0
        %447 = vmatprep.subr.mxu0 0.0
        %448 = vmatpush1.msra.mxu0 0.0
        %449 = vmatprep.subr.mxu0 0.0
        %450 = vmatpush1.msra.mxu0 0.0
        %451 = vmatprep.subr.mxu0 0.0
        %452 = vmatpush1.msra.mxu0 0.0
        %453 = vmatprep.subr.mxu0 0.0
        %454 = vmatpush1.msra.mxu0 0.0
        %455 = vmatprep.subr.mxu0 0.0
        %456 = vmatpush1.msra.mxu0 %v148
        %457 = vmatprep.subr.mxu0 0.0
        %458 = vmatpush1.msra.mxu0 %v147
        %459 = vmatprep.subr.mxu0 0.0
        %460 = vmatpush2.msra.mxu0 0.0
        %461 = vmatprep.subr.mxu0 0.0
        %462 = vmatpush2.msra.mxu0 0.0
        %463 = vmatprep.subr.mxu0 0.0
        %464 = vmatpush2.msra.mxu0 0.0
        %465 = vmatprep.subr.mxu0 0.0
        %466 = vmatpush2.msra.mxu0 0.0
        %467 = vmatprep.subr.mxu0 0.0
        %468 = vmatpush2.msra.mxu0 0.0
        %469 = vmatprep.subr.mxu0 0.0
        %470 = vmatpush2.msra.mxu0 0.0
        %471 = vmatprep.subr.mxu0 0.0
        %472 = vmatpush2.msra.mxu0 0.0
        %473 = vmatprep.subr.mxu0 0.0
        %474 = vmatpush2.msra.mxu0 0.0
        %475 = vmatprep.subr.mxu0 0.0
        %476 = vmatpush2.msra.mxu0 0.0
        %477 = vmatprep.subr.mxu0 0.0
        %478 = vmatpush2.msra.mxu0 0.0
        %479 = vmatprep.subr.mxu0 0.0
        %480 = vmatpush2.msra.mxu0 0.0
        %481 = vmatprep.subr.mxu0 0.0
        %482 = vmatpush2.msra.mxu0 0.0
        %483 = vmatprep.subr.mxu0 0.0
        %484 = vmatpush2.msra.mxu0 0.0
        %485 = vmatprep.subr.mxu0 0.0
        %486 = vmatpush2.msra.mxu0 0.0
        %487 = vmatprep.subr.mxu0 0.0
        %488 = vmatpush2.msra.mxu0 0.0
        %489 = vmatprep.subr.mxu0 0.0
        %490 = vmatpush2.msra.mxu0 0.0
        %491 = vmatprep.mubr.f32.mxu0 0.0
        %492 = vmatmul.mubr.f32.gmra.mxu0 %v425
        %v493 = vpop.f32.mrf.mxu0
        %v494 = vadd.f32 0.0, %v493
        %v495 = vpop.f32.mrf.mxu0
        %496 = vdwg.mxu0
        %v497 = vld [vmem:[%s117 + $0x8] sm:$0x1]
        %v498 = vld [vmem:[%s117 + $0x18] sm:$0x1]
        %v499 = vld [vmem:[%s117 + $0x28] sm:$0x1]
        %v500 = vld [vmem:[%s117 + $0x38] sm:$0x1]
        %v505 = vrot.slane %v498, 7
        %v506 = vsel %vm158, %v505, %v497
        %v507 = vrot.slane %v499, 6
        %v508 = vsel %vm161, %v507, %v506
        %v509 = vrot.slane %v500, 5
        %v510 = vsel %vm164, %v509, %v508
        %v511 = vsel %vm166, %v510, 0
        %513 = vmatprep.subr.mxu0 0.0
        %514 = vmatpush1.msra.mxu0 0.0
        %515 = vmatprep.subr.mxu0 0.0
        %516 = vmatpush1.msra.mxu0 0.0
        %517 = vmatprep.subr.mxu0 0.0
        %518 = vmatpush1.msra.mxu0 0.0
        %519 = vmatprep.subr.mxu0 0.0
        %520 = vmatpush1.msra.mxu0 0.0
        %521 = vmatprep.subr.mxu0 0.0
        %522 = vmatpush1.msra.mxu0 0.0
        %523 = vmatprep.subr.mxu0 0.0
        %524 = vmatpush1.msra.mxu0 0.0
        %525 = vmatprep.subr.mxu0 0.0
        %526 = vmatpush1.msra.mxu0 0.0
        %527 = vmatprep.subr.mxu0 0.0
        %528 = vmatpush1.msra.mxu0 0.0
        %529 = vmatprep.subr.mxu0 0.0
        %530 = vmatpush1.msra.mxu0 0.0
        %531 = vmatprep.subr.mxu0 0.0
        %532 = vmatpush1.msra.mxu0 0.0
        %533 = vmatprep.subr.mxu0 0.0
        %534 = vmatpush1.msra.mxu0 0.0
        %535 = vmatprep.subr.mxu0 0.0
        %536 = vmatpush1.msra.mxu0 0.0
        %537 = vmatprep.subr.mxu0 0.0
        %538 = vmatpush1.msra.mxu0 0.0
        %539 = vmatprep.subr.mxu0 0.0
        %540 = vmatpush1.msra.mxu0 0.0
        %541 = vmatprep.subr.mxu0 0.0
        %542 = vmatpush1.msra.mxu0 %v148
        %543 = vmatprep.subr.mxu0 0.0
        %544 = vmatpush1.msra.mxu0 %v147
        %545 = vmatprep.subr.mxu0 0.0
        %546 = vmatpush2.msra.mxu0 0.0
        %547 = vmatprep.subr.mxu0 0.0
        %548 = vmatpush2.msra.mxu0 0.0
        %549 = vmatprep.subr.mxu0 0.0
        %550 = vmatpush2.msra.mxu0 0.0
        %551 = vmatprep.subr.mxu0 0.0
        %552 = vmatpush2.msra.mxu0 0.0
        %553 = vmatprep.subr.mxu0 0.0
        %554 = vmatpush2.msra.mxu0 0.0
        %555 = vmatprep.subr.mxu0 0.0
        %556 = vmatpush2.msra.mxu0 0.0
        %557 = vmatprep.subr.mxu0 0.0
        %558 = vmatpush2.msra.mxu0 0.0
        %559 = vmatprep.subr.mxu0 0.0
        %560 = vmatpush2.msra.mxu0 0.0
        %561 = vmatprep.subr.mxu0 0.0
        %562 = vmatpush2.msra.mxu0 0.0
        %563 = vmatprep.subr.mxu0 0.0
        %564 = vmatpush2.msra.mxu0 0.0
        %565 = vmatprep.subr.mxu0 0.0
        %566 = vmatpush2.msra.mxu0 0.0
        %567 = vmatprep.subr.mxu0 0.0
        %568 = vmatpush2.msra.mxu0 0.0
        %569 = vmatprep.subr.mxu0 0.0
        %570 = vmatpush2.msra.mxu0 0.0
        %571 = vmatprep.subr.mxu0 0.0
        %572 = vmatpush2.msra.mxu0 0.0
        %573 = vmatprep.subr.mxu0 0.0
        %574 = vmatpush2.msra.mxu0 0.0
        %575 = vmatprep.subr.mxu0 0.0
        %576 = vmatpush2.msra.mxu0 0.0
        %577 = vmatprep.mubr.f32.mxu0 0.0
        %578 = vmatmul.mubr.f32.gmra.mxu0 %v511
        %v579 = vpop.f32.mrf.mxu0
        %v580 = vadd.f32 0.0, %v579
        %v581 = vpop.f32.mrf.mxu0
        %582 = vdwg.mxu0
        %v583 = vld [vmem:[%s117 + $0xa] sm:$0x1]
        %v584 = vld [vmem:[%s117 + $0x1a] sm:$0x1]
        %v585 = vld [vmem:[%s117 + $0x2a] sm:$0x1]
        %v586 = vld [vmem:[%s117 + $0x3a] sm:$0x1]
        %v591 = vrot.slane %v584, 7
        %v592 = vsel %vm158, %v591, %v583
        %v593 = vrot.slane %v585, 6
        %v594 = vsel %vm161, %v593, %v592
        %v595 = vrot.slane %v586, 5
        %v596 = vsel %vm164, %v595, %v594
        %v597 = vsel %vm166, %v596, 0
        %599 = vmatprep.subr.mxu0 0.0
        %600 = vmatpush1.msra.mxu0 0.0
        %601 = vmatprep.subr.mxu0 0.0
        %602 = vmatpush1.msra.mxu0 0.0
        %603 = vmatprep.subr.mxu0 0.0
        %604 = vmatpush1.msra.mxu0 0.0
        %605 = vmatprep.subr.mxu0 0.0
        %606 = vmatpush1.msra.mxu0 0.0
        %607 = vmatprep.subr.mxu0 0.0
        %608 = vmatpush1.msra.mxu0 0.0
        %609 = vmatprep.subr.mxu0 0.0
        %610 = vmatpush1.msra.mxu0 0.0
        %611 = vmatprep.subr.mxu0 0.0
        %612 = vmatpush1.msra.mxu0 0.0
        %613 = vmatprep.subr.mxu0 0.0
        %614 = vmatpush1.msra.mxu0 0.0
        %615 = vmatprep.subr.mxu0 0.0
        %616 = vmatpush1.msra.mxu0 0.0
        %617 = vmatprep.subr.mxu0 0.0
        %618 = vmatpush1.msra.mxu0 0.0
        %619 = vmatprep.subr.mxu0 0.0
        %620 = vmatpush1.msra.mxu0 0.0
        %621 = vmatprep.subr.mxu0 0.0
        %622 = vmatpush1.msra.mxu0 0.0
        %623 = vmatprep.subr.mxu0 0.0
        %624 = vmatpush1.msra.mxu0 0.0
        %625 = vmatprep.subr.mxu0 0.0
        %626 = vmatpush1.msra.mxu0 0.0
        %627 = vmatprep.subr.mxu0 0.0
        %628 = vmatpush1.msra.mxu0 %v148
        %629 = vmatprep.subr.mxu0 0.0
        %630 = vmatpush1.msra.mxu0 %v147
        %631 = vmatprep.subr.mxu0 0.0
        %632 = vmatpush2.msra.mxu0 0.0
        %633 = vmatprep.subr.mxu0 0.0
        %634 = vmatpush2.msra.mxu0 0.0
        %635 = vmatprep.subr.mxu0 0.0
        %636 = vmatpush2.msra.mxu0 0.0
        %637 = vmatprep.subr.mxu0 0.0
        %638 = vmatpush2.msra.mxu0 0.0
        %639 = vmatprep.subr.mxu0 0.0
        %640 = vmatpush2.msra.mxu0 0.0
        %641 = vmatprep.subr.mxu0 0.0
        %642 = vmatpush2.msra.mxu0 0.0
        %643 = vmatprep.subr.mxu0 0.0
        %644 = vmatpush2.msra.mxu0 0.0
        %645 = vmatprep.subr.mxu0 0.0
        %646 = vmatpush2.msra.mxu0 0.0
        %647 = vmatprep.subr.mxu0 0.0
        %648 = vmatpush2.msra.mxu0 0.0
        %649 = vmatprep.subr.mxu0 0.0
        %650 = vmatpush2.msra.mxu0 0.0
        %651 = vmatprep.subr.mxu0 0.0
        %652 = vmatpush2.msra.mxu0 0.0
        %653 = vmatprep.subr.mxu0 0.0
        %654 = vmatpush2.msra.mxu0 0.0
        %655 = vmatprep.subr.mxu0 0.0
        %656 = vmatpush2.msra.mxu0 0.0
        %657 = vmatprep.subr.mxu0 0.0
        %658 = vmatpush2.msra.mxu0 0.0
        %659 = vmatprep.subr.mxu0 0.0
        %660 = vmatpush2.msra.mxu0 0.0
        %661 = vmatprep.subr.mxu0 0.0
        %662 = vmatpush2.msra.mxu0 0.0
        %663 = vmatprep.mubr.f32.mxu0 0.0
        %664 = vmatmul.mubr.f32.gmra.mxu0 %v597
        %v665 = vpop.f32.mrf.mxu0
        %v666 = vadd.f32 0.0, %v665
        %v667 = vpop.f32.mrf.mxu0
        %668 = vdwg.mxu0
        %v669 = vld [vmem:[%s117 + $0xc] sm:$0x1]
        %v670 = vld [vmem:[%s117 + $0x1c] sm:$0x1]
        %v671 = vld [vmem:[%s117 + $0x2c] sm:$0x1]
        %v672 = vld [vmem:[%s117 + $0x3c] sm:$0x1]
        %v677 = vrot.slane %v670, 7
        %v678 = vsel %vm158, %v677, %v669
        %v679 = vrot.slane %v671, 6
        %v680 = vsel %vm161, %v679, %v678
        %v681 = vrot.slane %v672, 5
        %v682 = vsel %vm164, %v681, %v680
        %v683 = vsel %vm166, %v682, 0
        %685 = vmatprep.subr.mxu0 0.0
        %686 = vmatpush1.msra.mxu0 0.0
        %687 = vmatprep.subr.mxu0 0.0
        %688 = vmatpush1.msra.mxu0 0.0
        %689 = vmatprep.subr.mxu0 0.0
        %690 = vmatpush1.msra.mxu0 0.0
        %691 = vmatprep.subr.mxu0 0.0
        %692 = vmatpush1.msra.mxu0 0.0
        %693 = vmatprep.subr.mxu0 0.0
        %694 = vmatpush1.msra.mxu0 0.0
        %695 = vmatprep.subr.mxu0 0.0
        %696 = vmatpush1.msra.mxu0 0.0
        %697 = vmatprep.subr.mxu0 0.0
        %698 = vmatpush1.msra.mxu0 0.0
        %699 = vmatprep.subr.mxu0 0.0
        %700 = vmatpush1.msra.mxu0 0.0
        %701 = vmatprep.subr.mxu0 0.0
        %702 = vmatpush1.msra.mxu0 0.0
        %703 = vmatprep.subr.mxu0 0.0
        %704 = vmatpush1.msra.mxu0 0.0
        %705 = vmatprep.subr.mxu0 0.0
        %706 = vmatpush1.msra.mxu0 0.0
        %707 = vmatprep.subr.mxu0 0.0
        %708 = vmatpush1.msra.mxu0 0.0
        %709 = vmatprep.subr.mxu0 0.0
        %710 = vmatpush1.msra.mxu0 0.0
        %711 = vmatprep.subr.mxu0 0.0
        %712 = vmatpush1.msra.mxu0 0.0
        %713 = vmatprep.subr.mxu0 0.0
        %714 = vmatpush1.msra.mxu0 %v148
        %715 = vmatprep.subr.mxu0 0.0
        %716 = vmatpush1.msra.mxu0 %v147
        %717 = vmatprep.subr.mxu0 0.0
        %718 = vmatpush2.msra.mxu0 0.0
        %719 = vmatprep.subr.mxu0 0.0
        %720 = vmatpush2.msra.mxu0 0.0
        %721 = vmatprep.subr.mxu0 0.0
        %722 = vmatpush2.msra.mxu0 0.0
        %723 = vmatprep.subr.mxu0 0.0
        %724 = vmatpush2.msra.mxu0 0.0
        %725 = vmatprep.subr.mxu0 0.0
        %726 = vmatpush2.msra.mxu0 0.0
        %727 = vmatprep.subr.mxu0 0.0
        %728 = vmatpush2.msra.mxu0 0.0
        %729 = vmatprep.subr.mxu0 0.0
        %730 = vmatpush2.msra.mxu0 0.0
        %731 = vmatprep.subr.mxu0 0.0
        %732 = vmatpush2.msra.mxu0 0.0
        %733 = vmatprep.subr.mxu0 0.0
        %734 = vmatpush2.msra.mxu0 0.0
        %735 = vmatprep.subr.mxu0 0.0
        %736 = vmatpush2.msra.mxu0 0.0
        %737 = vmatprep.subr.mxu0 0.0
        %738 = vmatpush2.msra.mxu0 0.0
        %739 = vmatprep.subr.mxu0 0.0
        %740 = vmatpush2.msra.mxu0 0.0
        %741 = vmatprep.subr.mxu0 0.0
        %742 = vmatpush2.msra.mxu0 0.0
        %743 = vmatprep.subr.mxu0 0.0
        %744 = vmatpush2.msra.mxu0 0.0
        %745 = vmatprep.subr.mxu0 0.0
        %746 = vmatpush2.msra.mxu0 0.0
        %747 = vmatprep.subr.mxu0 0.0
        %748 = vmatpush2.msra.mxu0 0.0
        %749 = vmatprep.mubr.f32.mxu0 0.0
        %750 = vmatmul.mubr.f32.gmra.mxu0 %v683
        %v751 = vpop.f32.mrf.mxu0
        %v752 = vadd.f32 0.0, %v751
        %v753 = vpop.f32.mrf.mxu0
        %754 = vdwg.mxu0
        %v755 = vld [vmem:[%s117 + $0xe] sm:$0x1]
        %v756 = vld [vmem:[%s117 + $0x1e] sm:$0x1]
        %v757 = vld [vmem:[%s117 + $0x2e] sm:$0x1]
        %v758 = vld [vmem:[%s117 + $0x3e] sm:$0x1]
        %v763 = vrot.slane %v756, 7
        %v764 = vsel %vm158, %v763, %v755
        %v765 = vrot.slane %v757, 6
        %v766 = vsel %vm161, %v765, %v764
        %v767 = vrot.slane %v758, 5
        %v768 = vsel %vm164, %v767, %v766
        %v769 = vsel %vm166, %v768, 0
        %771 = vmatprep.subr.mxu0 0.0
        %772 = vmatpush1.msra.mxu0 0.0
        %773 = vmatprep.subr.mxu0 0.0
        %774 = vmatpush1.msra.mxu0 0.0
        %775 = vmatprep.subr.mxu0 0.0
        %776 = vmatpush1.msra.mxu0 0.0
        %777 = vmatprep.subr.mxu0 0.0
        %778 = vmatpush1.msra.mxu0 0.0
        %779 = vmatprep.subr.mxu0 0.0
        %780 = vmatpush1.msra.mxu0 0.0
        %781 = vmatprep.subr.mxu0 0.0
        %782 = vmatpush1.msra.mxu0 0.0
        %783 = vmatprep.subr.mxu0 0.0
        %784 = vmatpush1.msra.mxu0 0.0
        %785 = vmatprep.subr.mxu0 0.0
        %786 = vmatpush1.msra.mxu0 0.0
        %787 = vmatprep.subr.mxu0 0.0
        %788 = vmatpush1.msra.mxu0 0.0
        %789 = vmatprep.subr.mxu0 0.0
        %790 = vmatpush1.msra.mxu0 0.0
        %791 = vmatprep.subr.mxu0 0.0
        %792 = vmatpush1.msra.mxu0 0.0
        %793 = vmatprep.subr.mxu0 0.0
        %794 = vmatpush1.msra.mxu0 0.0
        %795 = vmatprep.subr.mxu0 0.0
        %796 = vmatpush1.msra.mxu0 0.0
        %797 = vmatprep.subr.mxu0 0.0
        %798 = vmatpush1.msra.mxu0 0.0
        %799 = vmatprep.subr.mxu0 0.0
        %800 = vmatpush1.msra.mxu0 %v148
        %801 = vmatprep.subr.mxu0 0.0
        %802 = vmatpush1.msra.mxu0 %v147
        %803 = vmatprep.subr.mxu0 0.0
        %804 = vmatpush2.msra.mxu0 0.0
        %805 = vmatprep.subr.mxu0 0.0
        %806 = vmatpush2.msra.mxu0 0.0
        %807 = vmatprep.subr.mxu0 0.0
        %808 = vmatpush2.msra.mxu0 0.0
        %809 = vmatprep.subr.mxu0 0.0
        %810 = vmatpush2.msra.mxu0 0.0
        %811 = vmatprep.subr.mxu0 0.0
        %812 = vmatpush2.msra.mxu0 0.0
        %813 = vmatprep.subr.mxu0 0.0
        %814 = vmatpush2.msra.mxu0 0.0
        %815 = vmatprep.subr.mxu0 0.0
        %816 = vmatpush2.msra.mxu0 0.0
        %817 = vmatprep.subr.mxu0 0.0
        %818 = vmatpush2.msra.mxu0 0.0
        %819 = vmatprep.subr.mxu0 0.0
        %820 = vmatpush2.msra.mxu0 0.0
        %821 = vmatprep.subr.mxu0 0.0
        %822 = vmatpush2.msra.mxu0 0.0
        %823 = vmatprep.subr.mxu0 0.0
        %824 = vmatpush2.msra.mxu0 0.0
        %825 = vmatprep.subr.mxu0 0.0
        %826 = vmatpush2.msra.mxu0 0.0
        %827 = vmatprep.subr.mxu0 0.0
        %828 = vmatpush2.msra.mxu0 0.0
        %829 = vmatprep.subr.mxu0 0.0
        %830 = vmatpush2.msra.mxu0 0.0
        %831 = vmatprep.subr.mxu0 0.0
        %832 = vmatpush2.msra.mxu0 0.0
        %833 = vmatprep.subr.mxu0 0.0
        %834 = vmatpush2.msra.mxu0 0.0
        %835 = vmatprep.mubr.f32.mxu0 0.0
        %836 = vmatmul.mubr.f32.gmra.mxu0 %v769
        %v837 = vpop.f32.mrf.mxu0
        %v838 = vadd.f32 0.0, %v837
        %v839 = vpop.f32.mrf.mxu0
        %840 = vdwg.mxu0
        %842 = vrot.lane.b32.xlu0 %v322, 8
        %v843 = vpop.permute.xlu0 %842
        %846 = vrot.lane.b32.xlu0 %v408, 16
        %v847 = vpop.permute.xlu0 %846
        %850 = vrot.lane.b32.xlu0 %v494, 24
        %v851 = vpop.permute.xlu0 %850
        %854 = vrot.lane.b32.xlu0 %v580, 32
        %v855 = vpop.permute.xlu0 %854
        %858 = vrot.lane.b32.xlu0 %v666, 40
        %v859 = vpop.permute.xlu0 %858
        %862 = vrot.lane.b32.xlu0 %v752, 48
        %v863 = vpop.permute.xlu0 %862
        %866 = vrot.lane.b32.xlu0 %v838, 56
        %v867 = vpop.permute.xlu0 %866
        %vm869 = vcmask 64512
        %v870 = vsel %vm869, %v236, %v843
        %v871 = vsel %vm166, %v870, %v847
        %vm872 = vcmask 195584
        %v873 = vsel %vm872, %v871, %v851
        %vm874 = vcmask 261120
        %v875 = vsel %vm874, %v873, %v855
        %vm876 = vcmask 326656
        %v877 = vsel %vm876, %v875, %v859
        %vm878 = vcmask 392192
        %v879 = vsel %vm878, %v877, %v863
        %vm880 = vcmask 457728
        %v881 = vsel %vm880, %v879, %v867
        %vm882 = vcmask 523264
        %883 = vst.msk [vmem:[%s135] sm:$0xff] %vm882, 0.0
        %vm884 = vcmask 519168
        %885 = vst.msk [vmem:[%s135] sm:$0xf] %vm884, %v881
        %s886 = sand.u32 %s52, 1
        %s887 = scalar_lea.sflag [#allocation4], %s886
        %s888 = sand.u32 %s52, 1
        %s889 = smul.addr %s888, 8
        %s890 = scalar_lea.vmem [#allocation5], %s889
        // Predicated region
        $region29: #{tpu_custom_call.1} parent=23 // pred_check
          %p891 = pneg %p62
        $region30: #{tpu_custom_call.1} parent=23 // pred_check_branch
          %893 = sbr.rel (%p891) target = $region32
        $region31: #{tpu_custom_call.1} parent=23 // pred_region
          %s895 = ssub.s32 128, 128
          %896 = vsyncadd %s887, %s895
          %s897 = smul.addr %s18, 128
          %s898 = scalar_lea.hbm %s1, %s897
          %s900 = sshll.u32 %s890, 4
          %s901 = int_to_ptr.vmem [resolvable:$true] %s900
          %903 = dma.vmem_to_hbm [thread:$0]  %s901, 128, %s898, %s887
        $region32: #{tpu_custom_call.1} parent=23 // pred_fallthru
          _
      $region24: #{tpu_custom_call.1} parent=5 // pred_fallthru
        _
      %p904 = scmp.le.s32.totalorder 2, %s13
      // Predicated region
      $region33: #{tpu_custom_call.1} parent=5 // pred_check
        %p905 = pneg %p904
      $region34: #{tpu_custom_call.1} parent=5 // pred_check_branch
        %907 = sbr.rel (%p905) target = $region36
      $region35: #{tpu_custom_call.1} parent=5 // pred_region
        %s908 = ssub.s32 %s13, 2
        // Predicated region
        $region37: #{tpu_custom_call.1} parent=35 // pred_check
          %p909 = pneg %p68
        $region38: #{tpu_custom_call.1} parent=35 // pred_check_branch
          %911 = sbr.rel (%p909) target = $region40
        $region39: #{tpu_custom_call.1} parent=35 // pred_region
          %s912 = sand.u32 %s53, 1
          %s913 = scalar_lea.sflag [#allocation4], %s912
          %s914 = sand.u32 %s53, 1
          %s915 = smul.addr %s914, 8
          %s916 = scalar_lea.vmem [#allocation5], %s915
          %917 = dma.done %s913, 128
        $region40: #{tpu_custom_call.1} parent=35 // pred_fallthru
          _
      $region36: #{tpu_custom_call.1} parent=5 // pred_fallthru
        _
    $region6: #{tpu_custom_call.1} parent=1 // loop_footer
      %s17 = sadd.s32 1, %s13
    $region7: #{tpu_custom_call.1} parent=1 // loop_footer_branch
      %12 = sbr.rel target = $region3
    $region8: #{tpu_custom_call.1} parent=1 // loop_exit
      _
    %918 = vsyncpa [#allocation3], 1
    %s919 = scalar_lea.sflag [#allocation3], 1
    %920 = vsyncpa %s919, 1
    %921 = vsyncpa [#allocation4], 1
    %s922 = scalar_lea.sflag [#allocation4], 1
    %923 = vsyncpa %s922, 1

</llo_original>
